<compile_context>
chip_gen: v5e
topology: v5e:2x2
jax: 0.10.0
libtpu: 0.0.40
codegen_flags: <defaults>
</compile_context>

<pallas_src>
import functools

import jax
import jax.numpy as jnp
import numpy as np
from jax.experimental import pallas as pl
from jax.experimental.pallas import tpu as pltpu


def conv_relu_ps_kernel(x_top_ref, x_cur_ref, x_bot_ref, w_ref, b_ref, o_ref,
                        *, k, cin, w_sz, out_feat, tile_h, halo_rows):
    """One (batch, row-tile) step: same-pad conv + bias + ReLU + PixelShuffle(2).

    x_top_ref: (1, halo_rows, W*Cin)    8-row block just above the tile
    x_cur_ref: (1, tile_h,    W*Cin)    the tile's own rows
    x_bot_ref: (1, halo_rows, W*Cin)    8-row block just below the tile
    w_ref:     (k, (W+2p)*Cin, W*Cout)  banded weights; output columns already
                                        permuted into pixel-shuffle order
    b_ref:     (1, W*Cout)              bias in the same permuted column order
    o_ref:     (1, 2*tile_h, 2*W*out_feat)  lane-dense pixel-shuffled output
    """
    pad = k // 2
    t = pl.program_id(1)
    nt = pl.num_programs(1)

    x_cur = x_cur_ref[0].astype(jnp.float32)                      # (TH, W*Cin)

    # Row halo: last `pad` rows of the block above / first `pad` rows of the
    # block below; zeroed at the image boundary ("same" padding).
    top = x_top_ref[0].astype(jnp.float32)[halo_rows - pad:, :]   # (pad, W*Cin)
    bot = x_bot_ref[0].astype(jnp.float32)[:pad, :]               # (pad, W*Cin)
    top = jnp.where(t > 0, top, 0.0)
    bot = jnp.where(t < nt - 1, bot, 0.0)

    # Zero-padded band, built ONCE per tile: (TH+2p, (W+2p)*Cin).
    rows = jnp.concatenate([top, x_cur, bot], axis=0)             # (TH+2p, W*Cin)
    zcol = jnp.zeros((tile_h + 2 * pad, pad * cin), jnp.float32)
    band = jnp.concatenate([zcol, rows, zcol], axis=1)            # (TH+2p, (W+2p)*Cin)

    # k banded matmuls accumulated; each LHS is just a sublane-shifted view of
    # the band -- no per-tap reshapes, only one band copy live at a time.
    acc = jnp.dot(band[0:tile_h, :], w_ref[0],
                  preferred_element_type=jnp.float32)             # (TH, W*Cout)
    for dy in range(1, k):
        acc += jnp.dot(band[dy:dy + tile_h, :], w_ref[dy],
                       preferred_element_type=jnp.float32)
    acc = jnp.maximum(acc + b_ref[...], 0.0)                      # bias + ReLU

    # PixelShuffle(2): columns were pre-permuted so each acc row holds
    # [output row 2h | output row 2h+1]; the shuffle is a plain aligned reshape
    # into the lane-dense (2*TH, 2*W*out_feat) output tile.
    o_ref[0] = acc.reshape(2 * tile_h, 2 * w_sz * out_feat).astype(o_ref.dtype)


def _vmem_budget_bytes():
    """Generation-aware VMEM budget (~half of physical per-core VMEM)."""
    cap = 64 * 1024 * 1024                        # conservative (v7x-sized) fallback
    try:
        info = pltpu.get_tpu_info()
        cap = int(getattr(info, "vmem_capacity_bytes", cap)) or cap
    except Exception:
        pass
    return min(cap // 2, 96 * 1024 * 1024)


def _pick_tile_h(N, H, W, cin, out_feat, k, itemsize, budget):
    cout = 4 * out_feat
    pad = k // 2

    def est_bytes(th):
        inp = 2 * (th + 16) * W * cin * itemsize            # 3 input streams, 2x buffered
        out = 2 * (2 * th) * (2 * W * out_feat) * itemsize  # output, 2x buffered
        wgt = 2 * k * (W + 2 * pad) * cin * (W * cout) * 4  # banded weights
        tmp = 4 * (th + 2 * pad) * (W + 2 * pad) * cin * 4  # band + shifted views
        tmp += 2 * th * W * cout * 4                        # accumulator
        return inp + out + wgt + tmp

    # Keep >= 2 row tiles when batch == 1 so a 2-TensorCore part (v7x) gets work
    # on both cores (both grid axes are "parallel").
    max_th = H if N >= 2 else max(H // 2, 8)
    tile_h = 8
    while (tile_h * 2 <= min(max_th, 256) and H % (tile_h * 2) == 0
           and est_bytes(tile_h * 2) <= budget):
        tile_h *= 2
    return tile_h


def upsampler_forward(x_nchw, weight_oihw, bias, kernel_size, *, tile_h=None):
    """UpSampler.forward: conv(n_feat -> 4*out_feat, k, same pad, bias) -> ReLU
       -> PixelShuffle(2).  Input/output are NCHW like the PyTorch module."""
    N, Cin, H, W = x_nchw.shape
    Cout = weight_oihw.shape[0]                   # 4 * out_feat
    assert Cout % 4 == 0
    out_feat = Cout // 4
    k = int(kernel_size)
    pad = k // 2
    assert k % 2 == 1 and 1 <= pad <= 8
    assert H % 8 == 0, "H must be a multiple of 8 (sublane tile)"
    # TODO(synk): support H not divisible by 8 (needs a ragged last row-tile).

    itemsize = jnp.dtype(x_nchw.dtype).itemsize
    budget = _vmem_budget_bytes()
    if tile_h is None:
        tile_h = _pick_tile_h(N, H, W, Cin, out_feat, k, itemsize, budget)
    assert H % tile_h == 0 and tile_h % 8 == 0
    nt = H // tile_h

    hb = 8                          # halo block rows (sublane quantum)
    th_blocks = tile_h // hb
    nhb = H // hb
    WC = W * Cin
    Wp = W + 2 * pad
    WCo_ps = 2 * W * out_feat       # lane width of the pixel-shuffled output
    # TODO(synk): fold the two 8-row halo streams into the main block via
    # pl.Element row offsets to cut the residual (2*hb/tile_h) extra input reads.

    # NCHW -> (N, H, W*Cin): one boundary transpose.
    # TODO(synk): in a channels-last pipeline this (and the final NCHW transpose
    # below) disappears; the kernel itself is channels-last native.
    x2 = jnp.transpose(x_nchw, (0, 2, 3, 1)).reshape(N, H, WC)

    # Banded weights, built once at trace time (tiny):
    #   wband[dy, p*Cin + ci, col]  with  col = i*(2W*outf) + (2w+j)*outf + c
    # so the conv accumulator comes out directly in pixel-shuffled column order.
    f32 = jnp.float32
    wt = jnp.transpose(weight_oihw.astype(f32), (2, 3, 1, 0))       # (ky, kx, Cin, Cout)
    wt = wt.reshape(k, k, Cin, out_feat, 2, 2)                      # [y, x, a, c, i, j]
    shift = (jnp.arange(Wp)[None, :, None] ==
             (jnp.arange(W)[None, None, :] + jnp.arange(k)[:, None, None])
             ).astype(f32)                                          # [x, p, w]
    wband = jnp.einsum("xpw,yxacij->ypaiwjc", shift, wt)
    wband = wband.reshape(k, Wp * Cin, W * Cout)

    bt = jnp.transpose(bias.astype(f32).reshape(out_feat, 2, 2), (1, 2, 0))  # [i, j, c]
    brow = jnp.broadcast_to(bt[:, None, :, :], (2, W, 2, out_feat))
    brow = brow.reshape(1, W * Cout)

    kernel = functools.partial(conv_relu_ps_kernel, k=k, cin=Cin, w_sz=W,
                               out_feat=out_feat, tile_h=tile_h, halo_rows=hb)

    # Cost estimate that counts halo re-reads and the actual banded-matmul flops.
    flops = 2 * N * H * k * (Wp * Cin) * (W * Cout)
    bytes_accessed = (N * nt * (tile_h + 2 * hb) * WC * itemsize
                      + wband.size * 4 + brow.size * 4
                      + N * 2 * H * WCo_ps * itemsize)
    cost = pl.CostEstimate(flops=int(flops), transcendentals=0,
                           bytes_accessed=int(bytes_accessed))

    y = pl.pallas_call(
        kernel,
        out_shape=jax.ShapeDtypeStruct((N, 2 * H, WCo_ps), x_nchw.dtype),
        grid_spec=pltpu.PrefetchScalarGridSpec(
            num_scalar_prefetch=0,
            grid=(N, nt),
            in_specs=[
                # 8-row block just above the tile (clamped; masked in kernel at t==0)
                pl.BlockSpec((1, hb, WC),
                             lambda n, t: (n, jnp.maximum(t * th_blocks - 1, 0), 0)),
                # the tile itself
                pl.BlockSpec((1, tile_h, WC), lambda n, t: (n, t, 0)),
                # 8-row block just below the tile (clamped; masked at t==nt-1)
                pl.BlockSpec((1, hb, WC),
                             lambda n, t: (n, jnp.minimum((t + 1) * th_blocks, nhb - 1), 0)),
                # banded weights / bias: small, resident across the grid
                pl.BlockSpec((k, Wp * Cin, W * Cout), lambda n, t: (0, 0, 0)),
                pl.BlockSpec((1, W * Cout), lambda n, t: (0, 0)),
            ],
            out_specs=pl.BlockSpec((1, 2 * tile_h, WCo_ps), lambda n, t: (n, t, 0)),
        ),
        compiler_params=pltpu.CompilerParams(
            dimension_semantics=("parallel", "parallel"),
            vmem_limit_bytes=int(max(budget, 32 * 1024 * 1024))),
        cost_estimate=cost,
    )(x2, x2, x2, wband, brow)

    # Back to NCHW (PyTorch interface).  PixelShuffle already happened in-kernel,
    # so this single transpose is the only post-pass.
    y = y.reshape(N, 2 * H, 2 * W, out_feat)
    return jnp.transpose(y, (0, 3, 1, 2))


def _reference(x_nchw, weight_oihw, bias, kernel_size):
    """Pure-JAX reference (conv + relu + pixel shuffle) for a sanity check."""
    pad = kernel_size // 2
    y = jax.lax.conv_general_dilated(
        x_nchw, weight_oihw, window_strides=(1, 1),
        padding=[(pad, pad), (pad, pad)],
        dimension_numbers=("NCHW", "OIHW", "NCHW"))
    y = jax.nn.relu(y + bias[None, :, None, None])
    N, C, H, W = y.shape
    out_feat = C // 4
    y = y.reshape(N, out_feat, 2, 2, H, W)
    y = jnp.transpose(y, (0, 1, 4, 2, 5, 3))
    return y.reshape(N, out_feat, 2 * H, 2 * W)


if __name__ == "__main__":
    # Module config: n_feat=4, out_feat=4, kernel_size=3
    n_feat, out_feat, kernel_size = 4, 4, 3
    N, H, W = 2, 16, 16

    key = jax.random.PRNGKey(0)
    kx, kw, kb = jax.random.split(key, 3)
    x = jax.random.normal(kx, (N, n_feat, H, W), dtype=jnp.float32)
    weight = 0.1 * jax.random.normal(
        kw, (4 * out_feat, n_feat, kernel_size, kernel_size), dtype=jnp.float32)
    bias = 0.1 * jax.random.normal(kb, (4 * out_feat,), dtype=jnp.float32)

    ref = _reference(x, weight, bias, kernel_size)

    # Multi-row-tile path: grid = (N, 2), exercises the halo masking.
    out = jax.block_until_ready(
        upsampler_forward(x, weight, bias, kernel_size, tile_h=8))
    np.testing.assert_allclose(np.asarray(out), np.asarray(ref),
                               rtol=2e-5, atol=2e-5)

    # Auto-sized row tile (generation-aware): grid = (N, 1) here.
    out2 = jax.block_until_ready(
        upsampler_forward(x, weight, bias, kernel_size))
    np.testing.assert_allclose(np.asarray(out2), np.asarray(ref),
                               rtol=2e-5, atol=2e-5)

    assert out.shape == (N, out_feat, 2 * H, 2 * W)
    print("KERNEL_OK")
</pallas_src>

<mosaic_0001>
module attributes {stable_mosaic.version = 11 : i64} {
  func.func @conv_relu_ps_kernel(%arg0: i32, %arg1: i32, %arg2: memref<1x8x64xf32, #tpu.memory_space<vmem>>, %arg3: memref<1x8x64xf32, #tpu.memory_space<vmem>>, %arg4: memref<1x8x64xf32, #tpu.memory_space<vmem>>, %arg5: memref<3x72x256xf32, #tpu.memory_space<vmem>>, %arg6: memref<1x256xf32, #tpu.memory_space<vmem>>, %arg7: memref<1x16x128xf32, #tpu.memory_space<vmem>>) attributes {dimension_semantics = [#tpu.dimension_semantics<parallel>, #tpu.dimension_semantics<parallel>], iteration_bounds = array<i64: 2, 2>, scalar_prefetch = 0 : i64, scratch_operands = 0 : i64, tpu.core_type = #tpu.core_type<tc>, window_params = [{transform_indices = @transform_0, window_bounds = array<i64: 1, 8, 64>}, {transform_indices = @transform_1, window_bounds = array<i64: 1, 8, 64>}, {transform_indices = @transform_2, window_bounds = array<i64: 1, 8, 64>}, {pipeline_mode = #tpu.pipeline_mode<synchronous>, transform_indices = @transform_3, window_bounds = array<i64: 3, 72, 256>}, {pipeline_mode = #tpu.pipeline_mode<synchronous>, transform_indices = @transform_4, window_bounds = array<i64: 1, 256>}, {transform_indices = @transform_5, window_bounds = array<i64: 1, 16, 128>}]} {
    %c0 = arith.constant 0 : index
    %c0_0 = arith.constant 0 : index
    %c0_1 = arith.constant 0 : index
    %0 = vector.load %arg3[%c0, %c0_0, %c0_1] : memref<1x8x64xf32, #tpu.memory_space<vmem>>, vector<1x8x64xf32>
    %1 = vector.shape_cast %0 : vector<1x8x64xf32> to vector<8x64xf32>
    %c0_2 = arith.constant 0 : index
    %c0_3 = arith.constant 0 : index
    %c0_4 = arith.constant 0 : index
    %2 = vector.load %arg2[%c0_2, %c0_3, %c0_4] : memref<1x8x64xf32, #tpu.memory_space<vmem>>, vector<1x8x64xf32>
    %3 = vector.shape_cast %2 : vector<1x8x64xf32> to vector<8x64xf32>
    %4 = vector.extract_strided_slice %3 {offsets = [7, 0], sizes = [1, 64], strides = [1, 1]} : vector<8x64xf32> to vector<1x64xf32>
    %c0_5 = arith.constant 0 : index
    %c0_6 = arith.constant 0 : index
    %c0_7 = arith.constant 0 : index
    %5 = vector.load %arg4[%c0_5, %c0_6, %c0_7] : memref<1x8x64xf32, #tpu.memory_space<vmem>>, vector<1x8x64xf32>
    %6 = vector.shape_cast %5 : vector<1x8x64xf32> to vector<8x64xf32>
    %7 = vector.extract_strided_slice %6 {offsets = [0, 0], sizes = [1, 64], strides = [1, 1]} : vector<8x64xf32> to vector<1x64xf32>
    %c0_i32 = arith.constant 0 : i32
    %8 = arith.cmpi sgt, %arg1, %c0_i32 : i32
    %cst = arith.constant 0.000000e+00 : f32
    %9 = vector.broadcast %cst : f32 to vector<1x64xf32>
    %10 = arith.select %8, %4, %9 : vector<1x64xf32>
    %c1_i32 = arith.constant 1 : i32
    %11 = arith.cmpi slt, %arg1, %c1_i32 : i32
    %cst_8 = arith.constant 0.000000e+00 : f32
    %12 = vector.broadcast %cst_8 : f32 to vector<1x64xf32>
    %13 = arith.select %11, %7, %12 : vector<1x64xf32>
    %14 = tpu.concatenate %10, %1, %13 in 0 : vector<1x64xf32>, vector<8x64xf32>, vector<1x64xf32> -> vector<10x64xf32>
    %cst_9 = arith.constant 0.000000e+00 : f32
    %15 = vector.broadcast %cst_9 : f32 to vector<10x4xf32>
    %16 = tpu.concatenate %15, %14, %15 in 1 : vector<10x4xf32>, vector<10x64xf32>, vector<10x4xf32> -> vector<10x72xf32>
    %17 = vector.extract_strided_slice %16 {offsets = [0, 0], sizes = [8, 72], strides = [1, 1]} : vector<10x72xf32> to vector<8x72xf32>
    %c0_10 = arith.constant 0 : index
    %c0_11 = arith.constant 0 : index
    %c0_12 = arith.constant 0 : index
    %18 = vector.load %arg5[%c0_10, %c0_11, %c0_12] : memref<3x72x256xf32, #tpu.memory_space<vmem>>, vector<1x72x256xf32>
    %19 = vector.shape_cast %18 : vector<1x72x256xf32> to vector<72x256xf32>
    %cst_13 = arith.constant dense<0.000000e+00> : vector<8x256xf32>
    %20 = tpu.matmul %17, %19, %cst_13 {dimension_numbers = #tpu.dot_dimension_numbers<[1], [0], [0], [1], [0, 0, 1, 1], [], []>} : vector<8x72xf32>, vector<72x256xf32>, vector<8x256xf32> -> vector<8x256xf32>
    %21 = vector.extract_strided_slice %16 {offsets = [1, 0], sizes = [8, 72], strides = [1, 1]} : vector<10x72xf32> to vector<8x72xf32>
    %c1 = arith.constant 1 : index
    %c0_14 = arith.constant 0 : index
    %c0_15 = arith.constant 0 : index
    %22 = vector.load %arg5[%c1, %c0_14, %c0_15] : memref<3x72x256xf32, #tpu.memory_space<vmem>>, vector<1x72x256xf32>
    %23 = vector.shape_cast %22 : vector<1x72x256xf32> to vector<72x256xf32>
    %cst_16 = arith.constant dense<0.000000e+00> : vector<8x256xf32>
    %24 = tpu.matmul %21, %23, %cst_16 {dimension_numbers = #tpu.dot_dimension_numbers<[1], [0], [0], [1], [0, 0, 1, 1], [], []>} : vector<8x72xf32>, vector<72x256xf32>, vector<8x256xf32> -> vector<8x256xf32>
    %25 = arith.addf %20, %24 : vector<8x256xf32>
    %26 = vector.extract_strided_slice %16 {offsets = [2, 0], sizes = [8, 72], strides = [1, 1]} : vector<10x72xf32> to vector<8x72xf32>
    %c2 = arith.constant 2 : index
    %c0_17 = arith.constant 0 : index
    %c0_18 = arith.constant 0 : index
    %27 = vector.load %arg5[%c2, %c0_17, %c0_18] : memref<3x72x256xf32, #tpu.memory_space<vmem>>, vector<1x72x256xf32>
    %28 = vector.shape_cast %27 : vector<1x72x256xf32> to vector<72x256xf32>
    %cst_19 = arith.constant dense<0.000000e+00> : vector<8x256xf32>
    %29 = tpu.matmul %26, %28, %cst_19 {dimension_numbers = #tpu.dot_dimension_numbers<[1], [0], [0], [1], [0, 0, 1, 1], [], []>} : vector<8x72xf32>, vector<72x256xf32>, vector<8x256xf32> -> vector<8x256xf32>
    %30 = arith.addf %25, %29 : vector<8x256xf32>
    %c0_20 = arith.constant 0 : index
    %c0_21 = arith.constant 0 : index
    %31 = vector.load %arg6[%c0_20, %c0_21] : memref<1x256xf32, #tpu.memory_space<vmem>>, vector<1x256xf32>
    %32 = vector.broadcast %31 : vector<1x256xf32> to vector<8x256xf32>
    %33 = arith.addf %30, %32 : vector<8x256xf32>
    %cst_22 = arith.constant 0.000000e+00 : f32
    %34 = vector.broadcast %cst_22 : f32 to vector<8x256xf32>
    %35 = arith.maximumf %33, %34 : vector<8x256xf32>
    %36 = vector.shape_cast %35 : vector<8x256xf32> to vector<16x128xf32>
    %c0_23 = arith.constant 0 : index
    %c0_24 = arith.constant 0 : index
    %c0_25 = arith.constant 0 : index
    %37 = vector.load %arg7[%c0_23, %c0_24, %c0_25] : memref<1x16x128xf32, #tpu.memory_space<vmem>>, vector<1x16x128xf32>
    %38 = vector.shape_cast %37 : vector<1x16x128xf32> to vector<16x128xf32>
    %39 = vector.shape_cast %36 : vector<16x128xf32> to vector<1x16x128xf32>
    tpu.vector_store %arg7[%c0_23, %c0_24, %c0_25], %39 {strides = array<i32>} : memref<1x16x128xf32, #tpu.memory_space<vmem>>, vector<1x16x128xf32>,
    return
  }
  func.func @transform_0(%arg0: i32, %arg1: i32) -> (i32, i32, i32) {
    %c1_i32 = arith.constant 1 : i32
    %0 = arith.muli %arg1, %c1_i32 : i32
    %c1_i32_0 = arith.constant 1 : i32
    %1 = arith.subi %0, %c1_i32_0 : i32
    %c0_i32 = arith.constant 0 : i32
    %2 = arith.maxsi %1, %c0_i32 : i32
    %c0_i32_1 = arith.constant 0 : i32
    %c0_i32_2 = arith.constant 0 : i32
    return %arg0, %2, %c0_i32_1 : i32, i32, i32
  }
  func.func @transform_1(%arg0: i32, %arg1: i32) -> (i32, i32, i32) {
    %c0_i32 = arith.constant 0 : i32
    %c0_i32_0 = arith.constant 0 : i32
    return %arg0, %arg1, %c0_i32 : i32, i32, i32
  }
  func.func @transform_2(%arg0: i32, %arg1: i32) -> (i32, i32, i32) {
    %c1_i32 = arith.constant 1 : i32
    %0 = arith.addi %arg1, %c1_i32 : i32
    %c1_i32_0 = arith.constant 1 : i32
    %1 = arith.muli %0, %c1_i32_0 : i32
    %c1_i32_1 = arith.constant 1 : i32
    %2 = arith.minsi %1, %c1_i32_1 : i32
    %c0_i32 = arith.constant 0 : i32
    %c0_i32_2 = arith.constant 0 : i32
    return %arg0, %2, %c0_i32 : i32, i32, i32
  }
  func.func @transform_3(%arg0: i32, %arg1: i32) -> (i32, i32, i32) {
    %c0_i32 = arith.constant 0 : i32
    %c0_i32_0 = arith.constant 0 : i32
    %c0_i32_1 = arith.constant 0 : i32
    %c0_i32_2 = arith.constant 0 : i32
    return %c0_i32, %c0_i32_0, %c0_i32_1 : i32, i32, i32
  }
  func.func @transform_4(%arg0: i32, %arg1: i32) -> (i32, i32) {
    %c0_i32 = arith.constant 0 : i32
    %c0_i32_0 = arith.constant 0 : i32
    %c0_i32_1 = arith.constant 0 : i32
    return %c0_i32, %c0_i32_0 : i32, i32
  }
  func.func @transform_5(%arg0: i32, %arg1: i32) -> (i32, i32, i32) {
    %c0_i32 = arith.constant 0 : i32
    %c0_i32_0 = arith.constant 0 : i32
    return %arg0, %arg1, %c0_i32 : i32, i32, i32
  }
}

</mosaic_0001>

<llo_original>
// kernel: tpu_custom_call.1
$region0: #{tpu_custom_call.1}
  #allocation0 [shape = 'u32[]', space=smem, size = 0x4, offset = 0x4, fixed_abs, tag = 'smem constant byte address 0x4 - core index']
  #allocation1 [shape = 'u32[72,128]{1,0:T(1,128)}', space=vmem, size = 0x9000, scoped, tag = 'internal scratch']
  %s0 = inlined_call_operand.hbm [shape: f32[2,16,64], index: 0, kind: input, shape index: {}]
  %s1 = inlined_call_operand.hbm [shape: f32[2,16,64], index: 1, kind: input, shape index: {}]
  %s2 = inlined_call_operand.hbm [shape: f32[2,16,64], index: 2, kind: input, shape index: {}]
  %s3 = inlined_call_operand.hbm [shape: f32[3,72,256], index: 3, kind: input, shape index: {}]
  %s4 = inlined_call_operand.vmem [shape: f32[1,256], index: 4, kind: input, shape index: {}]
  %s5 = inlined_call_operand.hbm [shape: f32[2,32,128], index: 5, kind: output, shape index: {}]
  %s6 = sld [smem:[#allocation0]]
  $region69: #{tpu_custom_call.1} parent=0
    _
  %s8 = ssub.s32 1, %s6
  %s9 = scalar_select 0, %s8, %s6
  $region1: #{tpu_custom_call.1} parent=0
    #allocation2 [shape = 'u8[8192]{0}', space=vmem, size = 0x2000, scoped, tag = 'input window, operand 0']
    #allocation3 [shape = 's32[2]{0}', space=sflag, size = 0x8, scoped, tag = 'scoped memory for tpu_custom_call.1']
    #allocation4 [shape = 's32[2]{0}', space=sflag, size = 0x8, scoped, tag = 'scoped memory for tpu_custom_call.1']
    #allocation5 [shape = 'u8[8192]{0}', space=vmem, size = 0x2000, scoped, tag = 'input window, operand 1']
    #allocation6 [shape = 's32[2]{0}', space=sflag, size = 0x8, scoped, tag = 'scoped memory for tpu_custom_call.1']
    #allocation7 [shape = 'u8[8192]{0}', space=vmem, size = 0x2000, scoped, tag = 'input window, operand 2']
    #allocation8 [shape = 'u8[221184]{0}', space=vmem, size = 0x36000, scoped, tag = 'input window, operand 3, single buffered']
    #allocation9 [shape = 's32[1]{0}', space=sflag, size = 0x4, scoped, tag = 'scoped memory for tpu_custom_call.1']
    #allocation10 [shape = 'u8[16384]{0}', space=vmem, size = 0x4000, scoped, tag = 'output window, operand 0']
    %10 = vsyncpa [#allocation3], 0
    %s11 = scalar_lea.sflag [#allocation3], 1
    %12 = vsyncpa %s11, 0
    %13 = vsyncpa [#allocation6], 0
    %s14 = scalar_lea.sflag [#allocation6], 1
    %15 = vsyncpa %s14, 0
    %16 = vsyncpa [#allocation9], 0
    %17 = vsyncpa [#allocation4], 0
    %s18 = scalar_lea.sflag [#allocation4], 1
    %19 = vsyncpa %s18, 0
    loop: start=0, step=1, limit=6
    $region2: #{tpu_custom_call.1} parent=1 // loop_pre_header
      _
    $region3: #{tpu_custom_call.1} parent=1 // loop_header
      %s21 = sphi 0, %s25
      %p22 = scmp.ge.s32.totalorder %s21, 6
      %s28 = sphi 0, %s40
      %s29 = sphi 0, %s36
      %s30 = sphi 0, %s28
      %s31 = sphi 0, %s29
      %s32 = sphi 0, %s30
      %s33 = sphi 0, %s31
      %s51 = sphi 0, %s53
      %s54 = sphi 0, %s51
      %s55 = sphi 0, %s54
      %s71 = sphi 0, %s55
      %s79 = sphi 0, %s81
      %s82 = sphi 0, %s79
      %s83 = sphi 0, %s82
      %s99 = sphi 0, %s83
      %s113 = sphi 0, %s115
      %s116 = sphi 0, %s113
      %s117 = sphi 0, %s116
      %s133 = sphi 0, %s117
      %s137 = sphi 0, %s137
      %s139 = sphi 0, %s137
      %s140 = sphi 0, %s139
      %s154 = sphi 0, %s140
      %s158 = sphi 0, %s158
      %s160 = sphi 0, %s158
      %s161 = sphi 0, %s160
      %s175 = sphi 0, %s161
      %s183 = sphi 0, %s185
      %s186 = sphi 0, %s183
      %s187 = sphi 0, %s186
      %s203 = sphi 0, %s187
    $region4: #{tpu_custom_call.1} parent=1 // loop_header_branch
      %24 = sbr.rel (%p22) target = $region8
    $region5: #{tpu_custom_call.1} parent=1 // loop_body
      %s26 = ssub.s32 %s21, 1
      %s27 = ssub.s32 %s21, 2
      %s34 = sadd.s32 1, %s29
      %p35 = scmp.ge.s32.totalorder %s34, 2
      %s36 = scalar_select %p35, 0, %s34
      %s37 = sadd.s32 1, %s28
      %s38 = scalar_select %p35, %s37, %s28
      %p39 = scmp.ge.s32.totalorder %s38, 2
      %s40 = scalar_select %p39, 0, %s38
      %s41 = ssub.s32 %s29, 1
      %p42 = scmp.gt.s32.totalorder %s41, 0
      %s43 = scalar_select %p42, %s41, 0
      %s44 = ssub.s32 %s36, 1
      %p45 = scmp.gt.s32.totalorder %s44, 0
      %s46 = scalar_select %p45, %s44, 0
      %s47 = ssub.s32 %s28, %s40
      %s48 = ssub.s32 %s43, %s46
      %s49 = sor.u32 %s47, %s48
      %p50 = scmp.eq.s32.totalorder %s49, 0
      %s52 = sadd.s32 %s51, 1
      %s53 = scalar_select %p50, %s51, %s52
      %p56 = pneg %p50
      %p57 = scmp.eq.s32.totalorder %s21, 3
      %p58 = por %p56, %p57
      %p59 = scmp.ne.s32.totalorder %s51, %s54
      %p60 = scmp.eq.s32.totalorder %s21, 0
      %p61 = por %p59, %p60
      %p62 = scmp.ne.s32.totalorder %s51, %s54
      %p63 = scmp.eq.s32.totalorder %s26, 3
      %p64 = por %p62, %p63
      %p65 = scmp.ne.s32.totalorder %s54, %s55
      %p66 = scmp.eq.s32.totalorder %s26, 0
      %p67 = por %p65, %p66
      %p68 = scmp.ne.s32.totalorder %s54, %s55
      %p69 = scmp.eq.s32.totalorder %s27, 3
      %p70 = por %p68, %p69
      %p72 = scmp.ne.s32.totalorder %s55, %s71
      %p73 = scmp.eq.s32.totalorder %s27, 0
      %p74 = por %p72, %p73
      %s75 = ssub.s32 %s28, %s40
      %s76 = ssub.s32 %s29, %s36
      %s77 = sor.u32 %s75, %s76
      %p78 = scmp.eq.s32.totalorder %s77, 0
      %s80 = sadd.s32 %s79, 1
      %s81 = scalar_select %p78, %s79, %s80
      %p84 = pneg %p78
      %p85 = scmp.eq.s32.totalorder %s21, 3
      %p86 = por %p84, %p85
      %p87 = scmp.ne.s32.totalorder %s79, %s82
      %p88 = scmp.eq.s32.totalorder %s21, 0
      %p89 = por %p87, %p88
      %p90 = scmp.ne.s32.totalorder %s79, %s82
      %p91 = scmp.eq.s32.totalorder %s26, 3
      %p92 = por %p90, %p91
      %p93 = scmp.ne.s32.totalorder %s82, %s83
      %p94 = scmp.eq.s32.totalorder %s26, 0
      %p95 = por %p93, %p94
      %p96 = scmp.ne.s32.totalorder %s82, %s83
      %p97 = scmp.eq.s32.totalorder %s27, 3
      %p98 = por %p96, %p97
      %p100 = scmp.ne.s32.totalorder %s83, %s99
      %p101 = scmp.eq.s32.totalorder %s27, 0
      %p102 = por %p100, %p101
      %s103 = sadd.s32 %s29, 1
      %p104 = scmp.lt.s32.totalorder %s103, 1
      %s105 = scalar_select %p104, %s103, 1
      %s106 = sadd.s32 %s36, 1
      %p107 = scmp.lt.s32.totalorder %s106, 1
      %s108 = scalar_select %p107, %s106, 1
      %s109 = ssub.s32 %s28, %s40
      %s110 = ssub.s32 %s105, %s108
      %s111 = sor.u32 %s109, %s110
      %p112 = scmp.eq.s32.totalorder %s111, 0
      %s114 = sadd.s32 %s113, 1
      %s115 = scalar_select %p112, %s113, %s114
      %p118 = pneg %p112
      %p119 = scmp.eq.s32.totalorder %s21, 3
      %p120 = por %p118, %p119
      %p121 = scmp.ne.s32.totalorder %s113, %s116
      %p122 = scmp.eq.s32.totalorder %s21, 0
      %p123 = por %p121, %p122
      %p124 = scmp.ne.s32.totalorder %s113, %s116
      %p125 = scmp.eq.s32.totalorder %s26, 3
      %p126 = por %p124, %p125
      %p127 = scmp.ne.s32.totalorder %s116, %s117
      %p128 = scmp.eq.s32.totalorder %s26, 0
      %p129 = por %p127, %p128
      %p130 = scmp.ne.s32.totalorder %s116, %s117
      %p131 = scmp.eq.s32.totalorder %s27, 3
      %p132 = por %p130, %p131
      %p134 = scmp.ne.s32.totalorder %s117, %s133
      %p135 = scmp.eq.s32.totalorder %s27, 0
      %p136 = por %p134, %p135
      %s138 = sadd.s32 %s137, 1
      %p141 = scmp.eq.s32.totalorder %s21, 3
      %p142 = scmp.ne.s32.totalorder %s137, %s139
      %p143 = scmp.eq.s32.totalorder %s21, 0
      %p144 = por %p142, %p143
      %p145 = scmp.ne.s32.totalorder %s137, %s139
      %p146 = scmp.eq.s32.totalorder %s26, 3
      %p147 = por %p145, %p146
      %p148 = scmp.ne.s32.totalorder %s139, %s140
      %p149 = scmp.eq.s32.totalorder %s26, 0
      %p150 = por %p148, %p149
      %p151 = scmp.ne.s32.totalorder %s139, %s140
      %p152 = scmp.eq.s32.totalorder %s27, 3
      %p153 = por %p151, %p152
      %p155 = scmp.ne.s32.totalorder %s140, %s154
      %p156 = scmp.eq.s32.totalorder %s27, 0
      %p157 = por %p155, %p156
      %s159 = sadd.s32 %s158, 1
      %p162 = scmp.eq.s32.totalorder %s21, 3
      %p163 = scmp.ne.s32.totalorder %s158, %s160
      %p164 = scmp.eq.s32.totalorder %s21, 0
      %p165 = por %p163, %p164
      %p166 = scmp.ne.s32.totalorder %s158, %s160
      %p167 = scmp.eq.s32.totalorder %s26, 3
      %p168 = por %p166, %p167
      %p169 = scmp.ne.s32.totalorder %s160, %s161
      %p170 = scmp.eq.s32.totalorder %s26, 0
      %p171 = por %p169, %p170
      %p172 = scmp.ne.s32.totalorder %s160, %s161
      %p173 = scmp.eq.s32.totalorder %s27, 3
      %p174 = por %p172, %p173
      %p176 = scmp.ne.s32.totalorder %s161, %s175
      %p177 = scmp.eq.s32.totalorder %s27, 0
      %p178 = por %p176, %p177
      %s179 = ssub.s32 %s28, %s40
      %s180 = ssub.s32 %s29, %s36
      %s181 = sor.u32 %s179, %s180
      %p182 = scmp.eq.s32.totalorder %s181, 0
      %s184 = sadd.s32 %s183, 1
      %s185 = scalar_select %p182, %s183, %s184
      %p188 = pneg %p182
      %p189 = scmp.eq.s32.totalorder %s21, 3
      %p190 = por %p188, %p189
      %p191 = scmp.ne.s32.totalorder %s183, %s186
      %p192 = scmp.eq.s32.totalorder %s21, 0
      %p193 = por %p191, %p192
      %p194 = scmp.ne.s32.totalorder %s183, %s186
      %p195 = scmp.eq.s32.totalorder %s26, 3
      %p196 = por %p194, %p195
      %p197 = scmp.ne.s32.totalorder %s186, %s187
      %p198 = scmp.eq.s32.totalorder %s26, 0
      %p199 = por %p197, %p198
      %p200 = scmp.ne.s32.totalorder %s186, %s187
      %p201 = scmp.eq.s32.totalorder %s27, 3
      %p202 = por %p200, %p201
      %p204 = scmp.ne.s32.totalorder %s187, %s203
      %p205 = scmp.eq.s32.totalorder %s27, 0
      %p206 = por %p204, %p205
      %p207 = scmp.le.s32.totalorder 1, %s21
      %p208 = scmp.lt.s32.totalorder %s21, 5
      %p209 = pnand %p207, %p208
      %p210 = pneg %p209
      // Predicated region
      $region9: #{tpu_custom_call.1} parent=5 // pred_check
        _
      $region10: #{tpu_custom_call.1} parent=5 // pred_check_branch
        %212 = sbr.rel (%p209) target = $region12
      $region11: #{tpu_custom_call.1} parent=5 // pred_region
        %s213 = ssub.s32 %s21, 1
        // Predicated region
        $region13: #{tpu_custom_call.1} parent=11 // pred_check
          %p214 = pneg %p150
        $region14: #{tpu_custom_call.1} parent=11 // pred_check_branch
          %216 = sbr.rel (%p214) target = $region16
        $region15: #{tpu_custom_call.1} parent=11 // pred_region
          %218 = vsyncadd [#allocation9], 0
          %s219 = sshll.u32 %s3, 4
          %s220 = int_to_ptr.hbm [resolvable:$true] %s219
          %s221 = sshll.u32 [#allocation8], 4
          %s222 = int_to_ptr.vmem [resolvable:$true] %s221
          %227 = dma.hbm_to_vmem [thread:$0]  %s220, 6912, %s222, [#allocation9], 256, 256, 16
        $region16: #{tpu_custom_call.1} parent=11 // pred_fallthru
          _
        // Predicated region
        $region17: #{tpu_custom_call.1} parent=11 // pred_check
          %p228 = pneg %p171
        $region18: #{tpu_custom_call.1} parent=11 // pred_check_branch
          %230 = sbr.rel (%p228) target = $region20
        $region19: #{tpu_custom_call.1} parent=11 // pred_region
          _
        $region20: #{tpu_custom_call.1} parent=11 // pred_fallthru
          _
      $region12: #{tpu_custom_call.1} parent=5 // pred_fallthru
        _
      %p231 = scmp.lt.s32.totalorder %s21, 4
      // Predicated region
      $region21: #{tpu_custom_call.1} parent=5 // pred_check
        %p232 = pneg %p231
      $region22: #{tpu_custom_call.1} parent=5 // pred_check_branch
        %234 = sbr.rel (%p232) target = $region24
      $region23: #{tpu_custom_call.1} parent=5 // pred_region
        // Predicated region
        $region25: #{tpu_custom_call.1} parent=23 // pred_check
          %p235 = pneg %p61
        $region26: #{tpu_custom_call.1} parent=23 // pred_check_branch
          %237 = sbr.rel (%p235) target = $region28
        $region27: #{tpu_custom_call.1} parent=23 // pred_region
          %s238 = sand.u32 %s51, 1
          %s239 = scalar_lea.sflag [#allocation3], %s238
          %s240 = sand.u32 %s51, 1
          %s241 = smul.addr %s240, 8
          %s242 = scalar_lea.vmem [#allocation2], %s241
          %s243 = ssub.s32 %s29, 1
          %p244 = scmp.gt.s32.totalorder %s243, 0
          %s245 = scalar_select %p244, %s243, 0
          %247 = vsyncadd %s239, 0
          %s248 = smul.addr %s28, 2
          %s249 = sadd.s32 %s245, %s248
          %s250 = smul.addr %s249, 8
          %s251 = scalar_lea.hbm %s0, %s250
          %s253 = sshll.u32 %s251, 4
          %s254 = int_to_ptr.hbm [resolvable:$true] %s253
          %s255 = sshll.u32 %s242, 4
          %s256 = int_to_ptr.vmem [resolvable:$true] %s255
          %258 = dma.hbm_to_vmem [thread:$0]  %s254, 128, %s256, %s239
        $region28: #{tpu_custom_call.1} parent=23 // pred_fallthru
          _
        // Predicated region
        $region29: #{tpu_custom_call.1} parent=23 // pred_check
          %p259 = pneg %p89
        $region30: #{tpu_custom_call.1} parent=23 // pred_check_branch
          %261 = sbr.rel (%p259) target = $region32
        $region31: #{tpu_custom_call.1} parent=23 // pred_region
          %s262 = sand.u32 %s21, 1
          %s263 = scalar_lea.sflag [#allocation6], %s262
          %s264 = sand.u32 %s79, 1
          %s265 = smul.addr %s264, 8
          %s266 = scalar_lea.vmem [#allocation5], %s265
          %268 = vsyncadd %s263, 0
          %s269 = smul.addr %s28, 2
          %s270 = sadd.s32 %s29, %s269
          %s271 = smul.addr %s270, 8
          %s272 = scalar_lea.hbm %s1, %s271
          %s274 = sshll.u32 %s272, 4
          %s275 = int_to_ptr.hbm [resolvable:$true] %s274
          %s276 = sshll.u32 %s266, 4
          %s277 = int_to_ptr.vmem [resolvable:$true] %s276
          %279 = dma.hbm_to_vmem [thread:$0]  %s275, 128, %s277, %s263
        $region32: #{tpu_custom_call.1} parent=23 // pred_fallthru
          _
        // Predicated region
        $region33: #{tpu_custom_call.1} parent=23 // pred_check
          %p280 = pneg %p123
        $region34: #{tpu_custom_call.1} parent=23 // pred_check_branch
          %282 = sbr.rel (%p280) target = $region36
        $region35: #{tpu_custom_call.1} parent=23 // pred_region
          %s283 = sand.u32 %s21, 1
          %s284 = scalar_lea.sflag [#allocation6], %s283
          %s285 = sand.u32 %s113, 1
          %s286 = smul.addr %s285, 8
          %s287 = scalar_lea.vmem [#allocation7], %s286
          %s288 = sadd.s32 %s29, 1
          %p289 = scmp.lt.s32.totalorder %s288, 1
          %s290 = scalar_select %p289, %s288, 1
          %292 = vsyncadd %s284, 0
          %s293 = smul.addr %s28, 2
          %s294 = sadd.s32 %s290, %s293
          %s295 = smul.addr %s294, 8
          %s296 = scalar_lea.hbm %s2, %s295
          %s298 = sshll.u32 %s296, 4
          %s299 = int_to_ptr.hbm [resolvable:$true] %s298
          %s300 = sshll.u32 %s287, 4
          %s301 = int_to_ptr.vmem [resolvable:$true] %s300
          %303 = dma.hbm_to_vmem [thread:$0]  %s299, 128, %s301, %s284
        $region36: #{tpu_custom_call.1} parent=23 // pred_fallthru
          _
      $region24: #{tpu_custom_call.1} parent=5 // pred_fallthru
        _
      %p304 = scmp.le.s32.totalorder 1, %s21
      %p305 = scmp.lt.s32.totalorder %s21, 5
      %p306 = pnand %p304, %p305
      %p307 = pneg %p306
      // Predicated region
      $region37: #{tpu_custom_call.1} parent=5 // pred_check
        _
      $region38: #{tpu_custom_call.1} parent=5 // pred_check_branch
        %309 = sbr.rel (%p306) target = $region40
      $region39: #{tpu_custom_call.1} parent=5 // pred_region
        %s310 = ssub.s32 %s21, 1
        %s311 = sand.u32 %s54, 1
        %s312 = scalar_lea.sflag [#allocation3], %s311
        %s313 = sand.u32 %s54, 1
        %s314 = smul.addr %s313, 8
        %s315 = scalar_lea.vmem [#allocation2], %s314
        // Predicated region
        $region41: #{tpu_custom_call.1} parent=39 // pred_check
          %p316 = pneg %p67
        $region42: #{tpu_custom_call.1} parent=39 // pred_check_branch
          %318 = sbr.rel (%p316) target = $region44
        $region43: #{tpu_custom_call.1} parent=39 // pred_region
          %320 = dma.done %s312, 128
        $region44: #{tpu_custom_call.1} parent=39 // pred_fallthru
          _
        %s321 = sand.u32 %s26, 1
        %s322 = scalar_lea.sflag [#allocation6], %s321
        %s323 = sand.u32 %s82, 1
        %s324 = smul.addr %s323, 8
        %s325 = scalar_lea.vmem [#allocation5], %s324
        // Predicated region
        $region45: #{tpu_custom_call.1} parent=39 // pred_check
          %p326 = pneg %p95
        $region46: #{tpu_custom_call.1} parent=39 // pred_check_branch
          %328 = sbr.rel (%p326) target = $region48
        $region47: #{tpu_custom_call.1} parent=39 // pred_region
          %330 = dma.done %s322, 128
        $region48: #{tpu_custom_call.1} parent=39 // pred_fallthru
          _
        %s331 = sand.u32 %s26, 1
        %s332 = scalar_lea.sflag [#allocation6], %s331
        %s333 = sand.u32 %s116, 1
        %s334 = smul.addr %s333, 8
        %s335 = scalar_lea.vmem [#allocation7], %s334
        // Predicated region
        $region49: #{tpu_custom_call.1} parent=39 // pred_check
          %p336 = pneg %p129
        $region50: #{tpu_custom_call.1} parent=39 // pred_check_branch
          %338 = sbr.rel (%p336) target = $region52
        $region51: #{tpu_custom_call.1} parent=39 // pred_region
          %340 = dma.done %s332, 128
        $region52: #{tpu_custom_call.1} parent=39 // pred_fallthru
          _
        // Predicated region
        $region53: #{tpu_custom_call.1} parent=39 // pred_check
          %p341 = pneg %p150
        $region54: #{tpu_custom_call.1} parent=39 // pred_check_branch
          %343 = sbr.rel (%p341) target = $region56
        $region55: #{tpu_custom_call.1} parent=39 // pred_region
          %345 = dma.done [#allocation9], 6912
        $region56: #{tpu_custom_call.1} parent=39 // pred_fallthru
          _
        %s346 = sand.u32 %s54, 1
        %s347 = scalar_lea.sflag [#allocation3], %s346
        %s348 = sand.u32 %s54, 1
        %s349 = smul.addr %s348, 8
        %s350 = scalar_lea.vmem [#allocation2], %s349
        %p351 = pneg %p67
        %p352 = pneg %p64
        %s353 = sand.u32 %s26, 1
        %s354 = scalar_lea.sflag [#allocation6], %s353
        %s355 = sand.u32 %s82, 1
        %s356 = smul.addr %s355, 8
        %s357 = scalar_lea.vmem [#allocation5], %s356
        %p358 = pneg %p95
        %p359 = pneg %p92
        %s360 = sand.u32 %s26, 1
        %s361 = scalar_lea.sflag [#allocation6], %s360
        %s362 = sand.u32 %s116, 1
        %s363 = smul.addr %s362, 8
        %s364 = scalar_lea.vmem [#allocation7], %s363
        %p365 = pneg %p129
        %p366 = pneg %p126
        %p367 = pneg %p150
        %p368 = pneg %p147
        %p369 = pneg %p171
        %p370 = pneg %p168
        %p371 = pneg %p199
        %p372 = pneg %p196
        %s373 = sand.u32 %s186, 1
        %s374 = scalar_lea.sflag [#allocation4], %s373
        %s375 = sand.u32 %s186, 1
        %s376 = smul.addr %s375, 16
        %s377 = scalar_lea.vmem [#allocation10], %s376
        %s378 = ssub.s32 %s31, 1
        %p379 = scmp.gt.s32.totalorder %s378, 0
        %s380 = scalar_select %p379, %s378, 0
        %s381 = sadd.s32 %s31, 1
        %p382 = scmp.lt.s32.totalorder %s381, 1
        %s383 = scalar_select %p382, %s381, 1
        %s384 = smul.u32 2, %s31
        %v385 = vld [vmem:[%s325] sm:$0xff]
        %v386 = vld [vmem:[%s315] sm:$0xff]
        %v387 = vld [vmem:[%s335] sm:$0xff]
        %p388 = scmp.gt.s32.totalorder %s31, 0
        %s389 = scalar_select %p388, 1, 0
        %v390 = vstv %s389
        %vm391 = vcmp.eq.s32.totalorder %v390, 1
        %v392 = vsel %vm391, %v386, 0.0
        %p393 = scmp.lt.s32.totalorder %s31, 1
        %s394 = scalar_select %p393, 1, 0
        %v395 = vstv %s394
        %vm396 = vcmp.eq.s32.totalorder %v395, 1
        %v397 = vsel %vm396, %v387, 0.0
        %v399 = vrot.slane %v392, 7
        %v402 = vrot.slane %v385, 7
        %v405 = vrot.slane %v397, 7
        %vm407 = vcmask 1040384
        %v408 = vsel %vm407, %v399, %v402
        %v409 = vsel %vm407, %v402, %v405
        %412 = vrot.lane.b32.xlu0 %v408, 4
        %v413 = vpop.permute.xlu0 %412
        %414 = vrot.lane.b32.xlu0 %v409, 4
        %v415 = vpop.permute.xlu0 %414
        %vm418 = vcmask 31744
        %v419 = vsel %vm418, 0.0, %v413
        %v420 = vsel %vm418, 0.0, %v415
        %vm421 = vcmask 556032
        %v422 = vsel %vm421, %v419, 0.0
        %v423 = vsel %vm421, %v420, 0.0
        %v424 = vld [vmem:[#allocation8] sm:$0xff]
        %v425 = vld [vmem:[#allocation8 + $0x8] sm:$0xff]
        %v426 = vld [vmem:[#allocation8 + $0x10] sm:$0xff]
        %v427 = vld [vmem:[#allocation8 + $0x18] sm:$0xff]
        %v428 = vld [vmem:[#allocation8 + $0x20] sm:$0xff]
        %v429 = vld [vmem:[#allocation8 + $0x28] sm:$0xff]
        %v430 = vld [vmem:[#allocation8 + $0x30] sm:$0xff]
        %v431 = vld [vmem:[#allocation8 + $0x38] sm:$0xff]
        %v432 = vld [vmem:[#allocation8 + $0x40] sm:$0xff]
        %v433 = vld [vmem:[#allocation8 + $0x48] sm:$0xff]
        %v434 = vld [vmem:[#allocation8 + $0x50] sm:$0xff]
        %v435 = vld [vmem:[#allocation8 + $0x58] sm:$0xff]
        %v436 = vld [vmem:[#allocation8 + $0x60] sm:$0xff]
        %v437 = vld [vmem:[#allocation8 + $0x68] sm:$0xff]
        %v438 = vld [vmem:[#allocation8 + $0x70] sm:$0xff]
        %v439 = vld [vmem:[#allocation8 + $0x78] sm:$0xff]
        %v440 = vld [vmem:[#allocation8 + $0x80] sm:$0xff]
        %v441 = vld [vmem:[#allocation8 + $0x88] sm:$0xff]
        %s442 = scalar_lea.vmem [#allocation8], 144
        %v443 = vld [vmem:[%s442] sm:$0xff]
        %v444 = vld [vmem:[%s442 + $0x8] sm:$0xff]
        %v445 = vld [vmem:[%s442 + $0x10] sm:$0xff]
        %v446 = vld [vmem:[%s442 + $0x18] sm:$0xff]
        %v447 = vld [vmem:[%s442 + $0x20] sm:$0xff]
        %v448 = vld [vmem:[%s442 + $0x28] sm:$0xff]
        %v449 = vld [vmem:[%s442 + $0x30] sm:$0xff]
        %v450 = vld [vmem:[%s442 + $0x38] sm:$0xff]
        %v451 = vld [vmem:[%s442 + $0x40] sm:$0xff]
        %v452 = vld [vmem:[%s442 + $0x48] sm:$0xff]
        %v453 = vld [vmem:[%s442 + $0x50] sm:$0xff]
        %v454 = vld [vmem:[%s442 + $0x58] sm:$0xff]
        %v455 = vld [vmem:[%s442 + $0x60] sm:$0xff]
        %v456 = vld [vmem:[%s442 + $0x68] sm:$0xff]
        %v457 = vld [vmem:[%s442 + $0x70] sm:$0xff]
        %v458 = vld [vmem:[%s442 + $0x78] sm:$0xff]
        %v459 = vld [vmem:[%s442 + $0x80] sm:$0xff]
        %v460 = vld [vmem:[%s442 + $0x88] sm:$0xff]
        %vm463 = vcmask 1046528
        %v464 = vrot.slane %v422, 1
        %v465 = vrot.slane %v423, 1
        %v466 = vsel %vm463, %v464, %v465
        %vm467 = vcmask 588800
        %v468 = vsel %vm467, %v466, 0
        %470 = vmatpush.msra.mxu0 0.0
        %471 = vmatpush.msra.mxu0 0.0
        %472 = vmatpush.msra.mxu0 0.0
        %473 = vmatpush.msra.mxu0 0.0
        %474 = vmatpush.msra.mxu0 0.0
        %475 = vmatpush.msra.mxu0 0.0
        %476 = vmatpush.msra.mxu0 0.0
        %477 = vmatpush.msra.mxu0 %v459
        %478 = vmatpush.msra.mxu0 %v457
        %479 = vmatpush.msra.mxu0 %v455
        %480 = vmatpush.msra.mxu0 %v453
        %481 = vmatpush.msra.mxu0 %v451
        %482 = vmatpush.msra.mxu0 %v449
        %483 = vmatpush.msra.mxu0 %v447
        %484 = vmatpush.msra.mxu0 %v445
        %485 = vmatpush.msra.mxu0 %v443
        %486 = vmatmul.f32.gmra.mxu0 %v468
        %v487 = vpop.f32.mrf.mxu0
        %v488 = vadd.f32 0.0, %v487
        %489 = vdwg.mxu0
        %490 = vmatpush.msra.mxu0 0.0
        %491 = vmatpush.msra.mxu0 0.0
        %492 = vmatpush.msra.mxu0 0.0
        %493 = vmatpush.msra.mxu0 0.0
        %494 = vmatpush.msra.mxu0 0.0
        %495 = vmatpush.msra.mxu0 0.0
        %496 = vmatpush.msra.mxu0 0.0
        %497 = vmatpush.msra.mxu0 %v460
        %498 = vmatpush.msra.mxu0 %v458
        %499 = vmatpush.msra.mxu0 %v456
        %500 = vmatpush.msra.mxu0 %v454
        %501 = vmatpush.msra.mxu0 %v452
        %502 = vmatpush.msra.mxu0 %v450
        %503 = vmatpush.msra.mxu0 %v448
        %504 = vmatpush.msra.mxu0 %v446
        %505 = vmatpush.msra.mxu0 %v444
        %506 = vmatmul.f32.gmra.mxu0 %v468
        %v507 = vpop.f32.mrf.mxu0
        %v508 = vadd.f32 0.0, %v507
        %509 = vdwg.mxu0
        %v510 = vsel %vm467, %v422, 0
        %512 = vmatpush.msra.mxu0 0.0
        %513 = vmatpush.msra.mxu0 0.0
        %514 = vmatpush.msra.mxu0 0.0
        %515 = vmatpush.msra.mxu0 0.0
        %516 = vmatpush.msra.mxu0 0.0
        %517 = vmatpush.msra.mxu0 0.0
        %518 = vmatpush.msra.mxu0 0.0
        %519 = vmatpush.msra.mxu0 %v440
        %520 = vmatpush.msra.mxu0 %v438
        %521 = vmatpush.msra.mxu0 %v436
        %522 = vmatpush.msra.mxu0 %v434
        %523 = vmatpush.msra.mxu0 %v432
        %524 = vmatpush.msra.mxu0 %v430
        %525 = vmatpush.msra.mxu0 %v428
        %526 = vmatpush.msra.mxu0 %v426
        %527 = vmatpush.msra.mxu0 %v424
        %528 = vmatmul.f32.gmra.mxu0 %v510
        %v529 = vpop.f32.mrf.mxu0
        %v530 = vadd.f32 %v488, %v529
        %531 = vdwg.mxu0
        %532 = vmatpush.msra.mxu0 0.0
        %533 = vmatpush.msra.mxu0 0.0
        %534 = vmatpush.msra.mxu0 0.0
        %535 = vmatpush.msra.mxu0 0.0
        %536 = vmatpush.msra.mxu0 0.0
        %537 = vmatpush.msra.mxu0 0.0
        %538 = vmatpush.msra.mxu0 0.0
        %539 = vmatpush.msra.mxu0 %v441
        %540 = vmatpush.msra.mxu0 %v439
        %541 = vmatpush.msra.mxu0 %v437
        %542 = vmatpush.msra.mxu0 %v435
        %543 = vmatpush.msra.mxu0 %v433
        %544 = vmatpush.msra.mxu0 %v431
        %545 = vmatpush.msra.mxu0 %v429
        %546 = vmatpush.msra.mxu0 %v427
        %547 = vmatpush.msra.mxu0 %v425
        %548 = vmatmul.f32.gmra.mxu0 %v510
        %v549 = vpop.f32.mrf.mxu0
        %v550 = vadd.f32 %v508, %v549
        %551 = vdwg.mxu0
        %s552 = scalar_lea.vmem [#allocation8], 288
        %v553 = vld [vmem:[%s552] sm:$0xff]
        %v554 = vld [vmem:[%s552 + $0x8] sm:$0xff]
        %v555 = vld [vmem:[%s552 + $0x10] sm:$0xff]
        %v556 = vld [vmem:[%s552 + $0x18] sm:$0xff]
        %v557 = vld [vmem:[%s552 + $0x20] sm:$0xff]
        %v558 = vld [vmem:[%s552 + $0x28] sm:$0xff]
        %v559 = vld [vmem:[%s552 + $0x30] sm:$0xff]
        %v560 = vld [vmem:[%s552 + $0x38] sm:$0xff]
        %v561 = vld [vmem:[%s552 + $0x40] sm:$0xff]
        %v562 = vld [vmem:[%s552 + $0x48] sm:$0xff]
        %v563 = vld [vmem:[%s552 + $0x50] sm:$0xff]
        %v564 = vld [vmem:[%s552 + $0x58] sm:$0xff]
        %v565 = vld [vmem:[%s552 + $0x60] sm:$0xff]
        %v566 = vld [vmem:[%s552 + $0x68] sm:$0xff]
        %v567 = vld [vmem:[%s552 + $0x70] sm:$0xff]
        %v568 = vld [vmem:[%s552 + $0x78] sm:$0xff]
        %v569 = vld [vmem:[%s552 + $0x80] sm:$0xff]
        %v570 = vld [vmem:[%s552 + $0x88] sm:$0xff]
        %vm571 = vcmask 1045504
        %v572 = vrot.slane %v422, 2
        %v573 = vrot.slane %v423, 2
        %v574 = vsel %vm571, %v572, %v573
        %v575 = vsel %vm467, %v574, 0
        %577 = vmatpush.msra.mxu0 0.0
        %578 = vmatpush.msra.mxu0 0.0
        %579 = vmatpush.msra.mxu0 0.0
        %580 = vmatpush.msra.mxu0 0.0
        %581 = vmatpush.msra.mxu0 0.0
        %582 = vmatpush.msra.mxu0 0.0
        %583 = vmatpush.msra.mxu0 0.0
        %584 = vmatpush.msra.mxu0 %v569
        %585 = vmatpush.msra.mxu0 %v567
        %586 = vmatpush.msra.mxu0 %v565
        %587 = vmatpush.msra.mxu0 %v563
        %588 = vmatpush.msra.mxu0 %v561
        %589 = vmatpush.msra.mxu0 %v559
        %590 = vmatpush.msra.mxu0 %v557
        %591 = vmatpush.msra.mxu0 %v555
        %592 = vmatpush.msra.mxu0 %v553
        %593 = vmatmul.f32.gmra.mxu0 %v575
        %v594 = vpop.f32.mrf.mxu0
        %v595 = vadd.f32 0.0, %v594
        %596 = vdwg.mxu0
        %597 = vmatpush.msra.mxu0 0.0
        %598 = vmatpush.msra.mxu0 0.0
        %599 = vmatpush.msra.mxu0 0.0
        %600 = vmatpush.msra.mxu0 0.0
        %601 = vmatpush.msra.mxu0 0.0
        %602 = vmatpush.msra.mxu0 0.0
        %603 = vmatpush.msra.mxu0 0.0
        %604 = vmatpush.msra.mxu0 %v570
        %605 = vmatpush.msra.mxu0 %v568
        %606 = vmatpush.msra.mxu0 %v566
        %607 = vmatpush.msra.mxu0 %v564
        %608 = vmatpush.msra.mxu0 %v562
        %609 = vmatpush.msra.mxu0 %v560
        %610 = vmatpush.msra.mxu0 %v558
        %611 = vmatpush.msra.mxu0 %v556
        %612 = vmatpush.msra.mxu0 %v554
        %613 = vmatmul.f32.gmra.mxu0 %v575
        %v614 = vpop.f32.mrf.mxu0
        %v615 = vadd.f32 0.0, %v614
        %616 = vdwg.mxu0
        %v617 = vadd.f32 %v530, %v595
        %v618 = vadd.f32 %v550, %v615
        %v619 = vld [vmem:[%s4] sm:$0x3]
        %v621 = vperm.slane %v619, 0
        %v622 = vperm.slane %v619, 1
        %v625 = vadd.f32 %v617, %v621
        %v626 = vadd.f32 %v618, %v622
        %v627 = vmax.f32 %v625, 0.0
        %v628 = vmax.f32 %v626, 0.0
        %v631 = vrot.slane %v628, 4
        %vm632 = vcmask 1043456
        %v633 = vsel %vm632, %v627, %v631
        %v634 = vsel %vm632, %v631, %v627
        %v635 = vrot.slane %v634, 4
        %v639 = vunpack.c.l.s4 1935823168
        %v640 = vunpack.c.0.s8 %v639
        %v641 = vperm.slane %v633, %v640
        %v643 = vunpack.c.l.s4 1935823168
        %v644 = vunpack.c.0.s8 %v643
        %v645 = vperm.slane %v635, %v644
        %646 = vst [vmem:[%s377] sm:$0xff] %v641
        %647 = vst [vmem:[%s377 + $0x8] sm:$0xff] %v645
        %s648 = sand.u32 %s186, 1
        %s649 = scalar_lea.sflag [#allocation4], %s648
        %s650 = sand.u32 %s186, 1
        %s651 = smul.addr %s650, 16
        %s652 = scalar_lea.vmem [#allocation10], %s651
        // Predicated region
        $region57: #{tpu_custom_call.1} parent=39 // pred_check
          %p653 = pneg %p196
        $region58: #{tpu_custom_call.1} parent=39 // pred_check_branch
          %655 = sbr.rel (%p653) target = $region60
        $region59: #{tpu_custom_call.1} parent=39 // pred_region
          %s656 = smul.u32 2, %s31
          %658 = vsyncadd %s649, 0
          %s659 = smul.addr %s30, 4
          %s660 = sadd.s32 %s656, %s659
          %s661 = smul.addr %s660, 8
          %s662 = scalar_lea.hbm %s5, %s661
          %s663 = sshll.u32 %s652, 4
          %s664 = int_to_ptr.vmem [resolvable:$true] %s663
          %s665 = sshll.u32 %s662, 4
          %s666 = int_to_ptr.hbm [resolvable:$true] %s665
          %671 = dma.vmem_to_hbm [thread:$0]  %s664, 256, %s666, %s649, 128, 128, 8
        $region60: #{tpu_custom_call.1} parent=39 // pred_fallthru
          _
      $region40: #{tpu_custom_call.1} parent=5 // pred_fallthru
        _
      %p672 = scmp.le.s32.totalorder 2, %s21
      // Predicated region
      $region61: #{tpu_custom_call.1} parent=5 // pred_check
        %p673 = pneg %p672
      $region62: #{tpu_custom_call.1} parent=5 // pred_check_branch
        %675 = sbr.rel (%p673) target = $region64
      $region63: #{tpu_custom_call.1} parent=5 // pred_region
        %s676 = ssub.s32 %s21, 2
        // Predicated region
        $region65: #{tpu_custom_call.1} parent=63 // pred_check
          %p677 = pneg %p202
        $region66: #{tpu_custom_call.1} parent=63 // pred_check_branch
          %679 = sbr.rel (%p677) target = $region68
        $region67: #{tpu_custom_call.1} parent=63 // pred_region
          %s680 = sand.u32 %s187, 1
          %s681 = scalar_lea.sflag [#allocation4], %s680
          %s682 = sand.u32 %s187, 1
          %s683 = smul.addr %s682, 16
          %s684 = scalar_lea.vmem [#allocation10], %s683
          %686 = dma.done %s681, 256
        $region68: #{tpu_custom_call.1} parent=63 // pred_fallthru
          _
      $region64: #{tpu_custom_call.1} parent=5 // pred_fallthru
        _
    $region6: #{tpu_custom_call.1} parent=1 // loop_footer
      %s25 = sadd.s32 1, %s21
    $region7: #{tpu_custom_call.1} parent=1 // loop_footer_branch
      %20 = sbr.rel target = $region3
    $region8: #{tpu_custom_call.1} parent=1 // loop_exit
      _
    %687 = vsyncpa [#allocation3], 1
    %s688 = scalar_lea.sflag [#allocation3], 1
    %689 = vsyncpa %s688, 1
    %690 = vsyncpa [#allocation6], 1
    %s691 = scalar_lea.sflag [#allocation6], 1
    %692 = vsyncpa %s691, 1
    %693 = vsyncpa [#allocation9], 1
    %694 = vsyncpa [#allocation4], 1
    %s695 = scalar_lea.sflag [#allocation4], 1
    %696 = vsyncpa %s695, 1

</llo_original>
